<compile_context>
chip_gen: v6e
topology: v6e:2x2x1
jax: 0.10.0
libtpu: 0.0.40
codegen_flags: <defaults>
</compile_context>

<pallas_src>
import functools
import math

import jax
import jax.numpy as jnp
from jax import lax
from jax.experimental import pallas as pl
from jax.experimental.pallas import tpu as pltpu

_HALF_LOG_2PI = 0.9189385332046727  # 0.5 * log(2*pi)


def _round_up(x, m):
    return ((x + m - 1) // m) * m


def _auto_tile_n(n, c):
    """Pick a batch tile: ~128K f32 elements per block.

    Keeps per-grid-step overhead negligible while the fused expression's live
    (C, tile_n) intermediates (plus double-buffered inputs) stay far under the
    default scoped-VMEM limit on every generation (v7x included)."""
    t = (131072 // max(c, 1)) // 128 * 128
    t = max(128, min(t, 16384))
    return min(t, _round_up(n, 128))


def _lgamma_digamma_pos(x):
    """(lgamma(x), digamma(x)) for x > 0 via a shared unconditional shift-by-4.

      lgamma(x)  = lgamma(x+4)  - log(x (x+1) (x+2) (x+3))
      digamma(x) = digamma(x+4) - (1/x + 1/(x+1) + 1/(x+2) + 1/(x+3))

    EUP cost per element: 2 logs + 2 approx reciprocals (4 pushes).  The shift
    product is ~x^4 (no f32 overflow for any realistic Dirichlet alpha); the
    reciprocal of the shift denominator gets one Newton step (2 VALU ops, free
    under the EUP bottleneck) so overall accuracy stays ~1e-6.
    """
    d01 = x * (x + 1.0)
    d23 = (x + 2.0) * (x + 3.0)
    d = d01 * d23                                  # x(x+1)(x+2)(x+3)
    nmr = (2.0 * x + 1.0) * d23 + (2.0 * x + 5.0) * d01
    r_d = pl.reciprocal(d, approx=True)
    r_d = r_d * (2.0 - d * r_d)                    # one Newton step -> ~f32 exact
    rsum = nmr * r_d                               # sum_{k=0..3} 1/(x+k)
    log_prod = jnp.log(d)

    z = x + 4.0
    log_z = jnp.log(z)
    zi = pl.reciprocal(z, approx=True)
    zi = zi * (2.0 - z * zi)                       # Newton (cheap VALU, EUP-free)
    zi2 = zi * zi
    lg_series = zi * (1.0 / 12.0 + zi2 * (-1.0 / 360.0 + zi2 * (1.0 / 1260.0)))
    lg = (z - 0.5) * log_z - z + _HALF_LOG_2PI + lg_series - log_prod
    dg_series = zi2 * (1.0 / 12.0 + zi2 * (-1.0 / 120.0 + zi2 * (1.0 / 252.0)))
    dg = log_z - 0.5 * zi - dg_series - rsum
    return lg, dg


def _edl_ce_kernel(pred_ref, tgt_ref, out_ref, *, annealing_coef, lnb_uni,
                   n_total, tile_n, needs_mask):
    p = pred_ref[...].astype(jnp.float32)          # (C, T): classes on sublanes
    tgt = tgt_ref[...]                             # (1, T) int32, lane-dense
    c, t = p.shape

    valid_b = None
    if needs_mask:                                 # static: only when N % tile_n != 0
        col = lax.broadcasted_iota(jnp.int32, (1, t), 1) + pl.program_id(0) * tile_n
        valid_b = col < n_total                    # (1, T) bool
        # Clamp garbage columns of the partial final block so the Gamma path
        # stays finite; their loss contribution is zeroed below.
        p = jnp.where(valid_b, p, 1.0)

    class_ids = lax.broadcasted_iota(jnp.int32, (c, t), 0)
    is_tgt = class_ids == tgt                      # (C, T) bool one-hot mask
    label = is_tgt.astype(jnp.float32)

    # CrossEntropyLoss per column: logsumexp(pred) - pred[tgt]
    col_max = jnp.max(p, axis=0, keepdims=True)
    lse = jnp.log(jnp.sum(jnp.exp(p - col_max), axis=0, keepdims=True)) + col_max
    picked = jnp.sum(label * p, axis=0, keepdims=True)
    ce = lse - picked                              # (1, T)

    # KL( Dir(alpha) || Dir(1) );  alpha = pred off-target, 1 at the target.
    # NOTE: matches the PyTorch module's implicit domain (pred > 0 at non-target
    # classes); non-positive values would NaN lgamma/digamma there too.
    alp = jnp.where(is_tgt, 1.0, p)                # (C, T), single select
    s_alpha = jnp.sum(alp, axis=0, keepdims=True)  # (1, T)

    lg_alp, dg_alp = _lgamma_digamma_pos(alp)
    lg_s, dg_s = _lgamma_digamma_pos(s_alpha)      # (1, T) path: negligible EUP cost

    lnB = lg_s - jnp.sum(lg_alp, axis=0, keepdims=True)
    kl = jnp.sum((alp - 1.0) * (dg_alp - dg_s), axis=0, keepdims=True) + lnB + lnb_uni

    loss = ce + annealing_coef * kl                # (1, T) per-column loss
    if needs_mask:
        loss = jnp.where(valid_b, loss, 0.0)
    out_ref[...] = loss                            # lane-dense, unmasked store


def edl_ce_loss(pred, tgt, *, num_classes, annealing_coef, tile_n=None):
    """pred: (N, C) evidential outputs (native dtype ok); tgt: (N,) int labels."""
    n, c = pred.shape
    assert c == num_classes, (c, num_classes)

    if tile_n is None:
        tile_n = _auto_tile_n(n, c)
    else:
        tile_n = max(128, min(_round_up(tile_n, 128), _round_up(n, 128)))
    n_tiles = -(-n // tile_n)
    n_pad = n_tiles * tile_n

    # classes -> sublanes, batch -> lanes (full vreg occupancy for the EUP work)
    pred_t = pred.T                                # (C, N), native dtype
    tgt2 = tgt.astype(jnp.int32).reshape(1, n)     # free metadata reshape

    kernel = functools.partial(
        _edl_ce_kernel,
        annealing_coef=float(annealing_coef),
        lnb_uni=-math.lgamma(float(num_classes)),
        n_total=n,
        tile_n=tile_n,
        needs_mask=(n % tile_n) != 0)

    per_col = pl.pallas_call(
        kernel,
        out_shape=jax.ShapeDtypeStruct((1, n_pad), jnp.float32),
        grid=(n_tiles,),
        in_specs=[
            pl.BlockSpec((c, tile_n), lambda i: (0, i)),
            pl.BlockSpec((1, tile_n), lambda i: (0, i)),
        ],
        out_specs=pl.BlockSpec((1, tile_n), lambda i: (0, i)),
        compiler_params=pltpu.CompilerParams(
            dimension_semantics=("parallel",)),     # lets v7x use both TCs
    )(pred_t, tgt2)

    # Invalid (padded) columns were zeroed in-kernel; tiny XLA reduce here.
    return jnp.sum(per_col) / n


def _reference(pred, tgt, num_classes, annealing_coef):
    """Plain-JAX replica of the PyTorch forward, for validation."""
    logp = jax.nn.log_softmax(pred, axis=1)
    label = jax.nn.one_hot(tgt, num_classes, dtype=jnp.float32)
    a = -jnp.mean(jnp.sum(label * logp, axis=1))
    alp = (pred - 1.0) * (1.0 - label) + 1.0
    s = jnp.sum(alp, axis=1, keepdims=True)
    lnb = jax.scipy.special.gammaln(s) - jnp.sum(
        jax.scipy.special.gammaln(alp), axis=1, keepdims=True)
    lnb_uni = -jax.scipy.special.gammaln(float(num_classes))
    dg0 = jax.scipy.special.digamma(s)
    dg1 = jax.scipy.special.digamma(alp)
    kl = jnp.sum((alp - 1.0) * (dg1 - dg0), axis=1, keepdims=True) + lnb + lnb_uni
    return jnp.mean(a + annealing_coef * kl)


if __name__ == "__main__":
    NUM_CLASSES = 16
    ANNEALING_COEF = 0.1

    # --- case 1: small batch, single (partial) tile ---
    N = 8
    key = jax.random.PRNGKey(0)
    kp, kt = jax.random.split(key)
    # pred is the evidential "alpha-like" output: keep it > 0 so Gamma terms are
    # defined (same domain the PyTorch module assumes).
    pred = jax.random.uniform(kp, (N, NUM_CLASSES), jnp.float32, minval=1.0, maxval=5.0)
    tgt = jax.random.randint(kt, (N,), 0, NUM_CLASSES, dtype=jnp.int32)

    loss = edl_ce_loss(pred, tgt, num_classes=NUM_CLASSES, annealing_coef=ANNEALING_COEF)
    loss = jax.block_until_ready(loss)
    ref = _reference(pred, tgt, NUM_CLASSES, ANNEALING_COEF)
    assert jnp.isfinite(loss), "kernel produced non-finite loss"
    assert jnp.allclose(loss, ref, rtol=1e-3, atol=1e-3), (loss, ref)

    # --- case 2: multi-tile grid with a partial final tile (masked path) ---
    kp2, kt2 = jax.random.split(jax.random.PRNGKey(0), 2)
    N2 = 300
    pred2 = jax.random.uniform(kp2, (N2, NUM_CLASSES), jnp.float32, minval=0.5, maxval=5.0)
    tgt2 = jax.random.randint(kt2, (N2,), 0, NUM_CLASSES, dtype=jnp.int32)
    loss2 = edl_ce_loss(pred2, tgt2, num_classes=NUM_CLASSES,
                        annealing_coef=ANNEALING_COEF, tile_n=128)
    loss2 = jax.block_until_ready(loss2)
    ref2 = _reference(pred2, tgt2, NUM_CLASSES, ANNEALING_COEF)
    assert jnp.allclose(loss2, ref2, rtol=1e-3, atol=1e-3), (loss2, ref2)

    # --- case 3: batch divides tiles exactly (mask-free fast path) ---
    kp3, kt3 = jax.random.split(jax.random.PRNGKey(0), 2)
    N3 = 256
    pred3 = jax.random.uniform(kp3, (N3, NUM_CLASSES), jnp.float32, minval=1.0, maxval=5.0)
    tgt3 = jax.random.randint(kt3, (N3,), 0, NUM_CLASSES, dtype=jnp.int32)
    loss3 = edl_ce_loss(pred3, tgt3, num_classes=NUM_CLASSES,
                        annealing_coef=ANNEALING_COEF, tile_n=128)
    loss3 = jax.block_until_ready(loss3)
    ref3 = _reference(pred3, tgt3, NUM_CLASSES, ANNEALING_COEF)
    assert jnp.allclose(loss3, ref3, rtol=1e-3, atol=1e-3), (loss3, ref3)

    print("KERNEL_OK")
</pallas_src>

<mosaic_0001>
module attributes {stable_mosaic.version = 11 : i64} {
  func.func @_edl_ce_kernel(%arg0: i32, %arg1: memref<16x128xf32, #tpu.memory_space<vmem>>, %arg2: memref<1x128xi32, #tpu.memory_space<vmem>>, %arg3: memref<1x128xf32, #tpu.memory_space<vmem>>) attributes {dimension_semantics = [#tpu.dimension_semantics<parallel>], iteration_bounds = array<i64: 1>, scalar_prefetch = 0 : i64, scratch_operands = 0 : i64, tpu.core_type = #tpu.core_type<tc>, window_params = [{transform_indices = @transform_0, window_bounds = array<i64: 16, 128>}, {transform_indices = @transform_1, window_bounds = array<i64: 1, 128>}, {transform_indices = @transform_2, window_bounds = array<i64: 1, 128>}]} {
    %c0 = arith.constant 0 : index
    %c0_0 = arith.constant 0 : index
    %0 = vector.load %arg1[%c0, %c0_0] : memref<16x128xf32, #tpu.memory_space<vmem>>, vector<16x128xf32>
    %c0_1 = arith.constant 0 : index
    %c0_2 = arith.constant 0 : index
    %1 = vector.load %arg2[%c0_1, %c0_2] : memref<1x128xi32, #tpu.memory_space<vmem>>, vector<1x128xi32>
    %2 = tpu.iota {dimensions = array<i32: 1>} : vector<1x128xi32>
    %c128_i32 = arith.constant 128 : i32
    %3 = arith.muli %arg0, %c128_i32 : i32
    %4 = vector.broadcast %3 : i32 to vector<1x128xi32>
    %5 = arith.addi %2, %4 : vector<1x128xi32>
    %c8_i32 = arith.constant 8 : i32
    %6 = vector.broadcast %c8_i32 : i32 to vector<1x128xi32>
    %7 = arith.cmpi slt, %5, %6 : vector<1x128xi32>
    %cst = arith.constant 1.000000e+00 : f32
    %8 = vector.shape_cast %7 : vector<1x128xi1> to vector<1x128xi1>
    %9 = vector.broadcast %8 : vector<1x128xi1> to vector<16x128xi1>
    %10 = vector.broadcast %cst : f32 to vector<16x128xf32>
    %11 = arith.select %9, %0, %10 : vector<16x128xi1>, vector<16x128xf32>
    %12 = tpu.iota {dimensions = array<i32: 0>} : vector<16x128xi32>
    %13 = vector.broadcast %1 : vector<1x128xi32> to vector<16x128xi32>
    %14 = arith.cmpi eq, %12, %13 : vector<16x128xi32>
    %15 = arith.extui %14 : vector<16x128xi1> to vector<16x128xi32>
    %16 = arith.sitofp %15 : vector<16x128xi32> to vector<16x128xf32>
    %cst_3 = arith.constant dense<0xFF800000> : vector<128xf32>
    %17 = vector.multi_reduction <maximumf>, %11, %cst_3 [0] : vector<16x128xf32> to vector<128xf32>
    %18 = vector.shape_cast %17 : vector<128xf32> to vector<1x128xf32>
    %19 = vector.broadcast %18 : vector<1x128xf32> to vector<16x128xf32>
    %20 = arith.subf %11, %19 : vector<16x128xf32>
    %21 = math.exp %20 : vector<16x128xf32>
    %cst_4 = arith.constant dense<0.000000e+00> : vector<128xf32>
    %22 = vector.multi_reduction <add>, %21, %cst_4 [0] : vector<16x128xf32> to vector<128xf32>
    %23 = vector.shape_cast %22 : vector<128xf32> to vector<1x128xf32>
    %24 = math.log %23 : vector<1x128xf32>
    %25 = arith.addf %24, %18 : vector<1x128xf32>
    %26 = arith.mulf %16, %11 : vector<16x128xf32>
    %cst_5 = arith.constant dense<0.000000e+00> : vector<128xf32>
    %27 = vector.multi_reduction <add>, %26, %cst_5 [0] : vector<16x128xf32> to vector<128xf32>
    %28 = vector.shape_cast %27 : vector<128xf32> to vector<1x128xf32>
    %29 = arith.subf %25, %28 : vector<1x128xf32>
    %cst_6 = arith.constant 1.000000e+00 : f32
    %30 = vector.broadcast %cst_6 : f32 to vector<16x128xf32>
    %31 = arith.select %14, %30, %11 : vector<16x128xi1>, vector<16x128xf32>
    %cst_7 = arith.constant dense<0.000000e+00> : vector<128xf32>
    %32 = vector.multi_reduction <add>, %31, %cst_7 [0] : vector<16x128xf32> to vector<128xf32>
    %33 = vector.shape_cast %32 : vector<128xf32> to vector<1x128xf32>
    %cst_8 = arith.constant 1.000000e+00 : f32
    %34 = vector.broadcast %cst_8 : f32 to vector<16x128xf32>
    %35 = arith.addf %31, %34 : vector<16x128xf32>
    %36 = arith.mulf %31, %35 : vector<16x128xf32>
    %cst_9 = arith.constant 2.000000e+00 : f32
    %37 = vector.broadcast %cst_9 : f32 to vector<16x128xf32>
    %38 = arith.addf %31, %37 : vector<16x128xf32>
    %cst_10 = arith.constant 3.000000e+00 : f32
    %39 = vector.broadcast %cst_10 : f32 to vector<16x128xf32>
    %40 = arith.addf %31, %39 : vector<16x128xf32>
    %41 = arith.mulf %38, %40 : vector<16x128xf32>
    %42 = arith.mulf %36, %41 : vector<16x128xf32>
    %cst_11 = arith.constant 2.000000e+00 : f32
    %43 = vector.broadcast %cst_11 : f32 to vector<16x128xf32>
    %44 = arith.mulf %43, %31 : vector<16x128xf32>
    %cst_12 = arith.constant 1.000000e+00 : f32
    %45 = vector.broadcast %cst_12 : f32 to vector<16x128xf32>
    %46 = arith.addf %44, %45 : vector<16x128xf32>
    %47 = arith.mulf %46, %41 : vector<16x128xf32>
    %cst_13 = arith.constant 2.000000e+00 : f32
    %48 = vector.broadcast %cst_13 : f32 to vector<16x128xf32>
    %49 = arith.mulf %48, %31 : vector<16x128xf32>
    %cst_14 = arith.constant 5.000000e+00 : f32
    %50 = vector.broadcast %cst_14 : f32 to vector<16x128xf32>
    %51 = arith.addf %49, %50 : vector<16x128xf32>
    %52 = arith.mulf %51, %36 : vector<16x128xf32>
    %53 = arith.addf %47, %52 : vector<16x128xf32>
    %54 = tpu.reciprocal %42 {approx = true} : vector<16x128xf32> -> vector<16x128xf32>
    %55 = arith.mulf %42, %54 : vector<16x128xf32>
    %cst_15 = arith.constant 2.000000e+00 : f32
    %56 = vector.broadcast %cst_15 : f32 to vector<16x128xf32>
    %57 = arith.subf %56, %55 : vector<16x128xf32>
    %58 = arith.mulf %54, %57 : vector<16x128xf32>
    %59 = arith.mulf %53, %58 : vector<16x128xf32>
    %60 = math.log %42 : vector<16x128xf32>
    %cst_16 = arith.constant 4.000000e+00 : f32
    %61 = vector.broadcast %cst_16 : f32 to vector<16x128xf32>
    %62 = arith.addf %31, %61 : vector<16x128xf32>
    %63 = math.log %62 : vector<16x128xf32>
    %64 = tpu.reciprocal %62 {approx = true} : vector<16x128xf32> -> vector<16x128xf32>
    %65 = arith.mulf %62, %64 : vector<16x128xf32>
    %cst_17 = arith.constant 2.000000e+00 : f32
    %66 = vector.broadcast %cst_17 : f32 to vector<16x128xf32>
    %67 = arith.subf %66, %65 : vector<16x128xf32>
    %68 = arith.mulf %64, %67 : vector<16x128xf32>
    %69 = arith.mulf %68, %68 : vector<16x128xf32>
    %cst_18 = arith.constant 7.93650805E-4 : f32
    %70 = vector.broadcast %cst_18 : f32 to vector<16x128xf32>
    %71 = arith.mulf %69, %70 : vector<16x128xf32>
    %cst_19 = arith.constant -0.00277777785 : f32
    %72 = vector.broadcast %cst_19 : f32 to vector<16x128xf32>
    %73 = arith.addf %72, %71 : vector<16x128xf32>
    %74 = arith.mulf %69, %73 : vector<16x128xf32>
    %cst_20 = arith.constant 0.0833333358 : f32
    %75 = vector.broadcast %cst_20 : f32 to vector<16x128xf32>
    %76 = arith.addf %75, %74 : vector<16x128xf32>
    %77 = arith.mulf %68, %76 : vector<16x128xf32>
    %cst_21 = arith.constant 5.000000e-01 : f32
    %78 = vector.broadcast %cst_21 : f32 to vector<16x128xf32>
    %79 = arith.subf %62, %78 : vector<16x128xf32>
    %80 = arith.mulf %79, %63 : vector<16x128xf32>
    %81 = arith.subf %80, %62 : vector<16x128xf32>
    %cst_22 = arith.constant 0.918938517 : f32
    %82 = vector.broadcast %cst_22 : f32 to vector<16x128xf32>
    %83 = arith.addf %81, %82 : vector<16x128xf32>
    %84 = arith.addf %83, %77 : vector<16x128xf32>
    %85 = arith.subf %84, %60 : vector<16x128xf32>
    %cst_23 = arith.constant 0.0039682542 : f32
    %86 = vector.broadcast %cst_23 : f32 to vector<16x128xf32>
    %87 = arith.mulf %69, %86 : vector<16x128xf32>
    %cst_24 = arith.constant -0.00833333377 : f32
    %88 = vector.broadcast %cst_24 : f32 to vector<16x128xf32>
    %89 = arith.addf %88, %87 : vector<16x128xf32>
    %90 = arith.mulf %69, %89 : vector<16x128xf32>
    %cst_25 = arith.constant 0.0833333358 : f32
    %91 = vector.broadcast %cst_25 : f32 to vector<16x128xf32>
    %92 = arith.addf %91, %90 : vector<16x128xf32>
    %93 = arith.mulf %69, %92 : vector<16x128xf32>
    %cst_26 = arith.constant 5.000000e-01 : f32
    %94 = vector.broadcast %cst_26 : f32 to vector<16x128xf32>
    %95 = arith.mulf %94, %68 : vector<16x128xf32>
    %96 = arith.subf %63, %95 : vector<16x128xf32>
    %97 = arith.subf %96, %93 : vector<16x128xf32>
    %98 = arith.subf %97, %59 : vector<16x128xf32>
    %cst_27 = arith.constant 1.000000e+00 : f32
    %99 = vector.broadcast %cst_27 : f32 to vector<1x128xf32>
    %100 = arith.addf %33, %99 : vector<1x128xf32>
    %101 = arith.mulf %33, %100 : vector<1x128xf32>
    %cst_28 = arith.constant 2.000000e+00 : f32
    %102 = vector.broadcast %cst_28 : f32 to vector<1x128xf32>
    %103 = arith.addf %33, %102 : vector<1x128xf32>
    %cst_29 = arith.constant 3.000000e+00 : f32
    %104 = vector.broadcast %cst_29 : f32 to vector<1x128xf32>
    %105 = arith.addf %33, %104 : vector<1x128xf32>
    %106 = arith.mulf %103, %105 : vector<1x128xf32>
    %107 = arith.mulf %101, %106 : vector<1x128xf32>
    %cst_30 = arith.constant 2.000000e+00 : f32
    %108 = vector.broadcast %cst_30 : f32 to vector<1x128xf32>
    %109 = arith.mulf %108, %33 : vector<1x128xf32>
    %cst_31 = arith.constant 1.000000e+00 : f32
    %110 = vector.broadcast %cst_31 : f32 to vector<1x128xf32>
    %111 = arith.addf %109, %110 : vector<1x128xf32>
    %112 = arith.mulf %111, %106 : vector<1x128xf32>
    %cst_32 = arith.constant 2.000000e+00 : f32
    %113 = vector.broadcast %cst_32 : f32 to vector<1x128xf32>
    %114 = arith.mulf %113, %33 : vector<1x128xf32>
    %cst_33 = arith.constant 5.000000e+00 : f32
    %115 = vector.broadcast %cst_33 : f32 to vector<1x128xf32>
    %116 = arith.addf %114, %115 : vector<1x128xf32>
    %117 = arith.mulf %116, %101 : vector<1x128xf32>
    %118 = arith.addf %112, %117 : vector<1x128xf32>
    %119 = tpu.reciprocal %107 {approx = true} : vector<1x128xf32> -> vector<1x128xf32>
    %120 = arith.mulf %107, %119 : vector<1x128xf32>
    %cst_34 = arith.constant 2.000000e+00 : f32
    %121 = vector.broadcast %cst_34 : f32 to vector<1x128xf32>
    %122 = arith.subf %121, %120 : vector<1x128xf32>
    %123 = arith.mulf %119, %122 : vector<1x128xf32>
    %124 = arith.mulf %118, %123 : vector<1x128xf32>
    %125 = math.log %107 : vector<1x128xf32>
    %cst_35 = arith.constant 4.000000e+00 : f32
    %126 = vector.broadcast %cst_35 : f32 to vector<1x128xf32>
    %127 = arith.addf %33, %126 : vector<1x128xf32>
    %128 = math.log %127 : vector<1x128xf32>
    %129 = tpu.reciprocal %127 {approx = true} : vector<1x128xf32> -> vector<1x128xf32>
    %130 = arith.mulf %127, %129 : vector<1x128xf32>
    %cst_36 = arith.constant 2.000000e+00 : f32
    %131 = vector.broadcast %cst_36 : f32 to vector<1x128xf32>
    %132 = arith.subf %131, %130 : vector<1x128xf32>
    %133 = arith.mulf %129, %132 : vector<1x128xf32>
    %134 = arith.mulf %133, %133 : vector<1x128xf32>
    %cst_37 = arith.constant 7.93650805E-4 : f32
    %135 = vector.broadcast %cst_37 : f32 to vector<1x128xf32>
    %136 = arith.mulf %134, %135 : vector<1x128xf32>
    %cst_38 = arith.constant -0.00277777785 : f32
    %137 = vector.broadcast %cst_38 : f32 to vector<1x128xf32>
    %138 = arith.addf %137, %136 : vector<1x128xf32>
    %139 = arith.mulf %134, %138 : vector<1x128xf32>
    %cst_39 = arith.constant 0.0833333358 : f32
    %140 = vector.broadcast %cst_39 : f32 to vector<1x128xf32>
    %141 = arith.addf %140, %139 : vector<1x128xf32>
    %142 = arith.mulf %133, %141 : vector<1x128xf32>
    %cst_40 = arith.constant 5.000000e-01 : f32
    %143 = vector.broadcast %cst_40 : f32 to vector<1x128xf32>
    %144 = arith.subf %127, %143 : vector<1x128xf32>
    %145 = arith.mulf %144, %128 : vector<1x128xf32>
    %146 = arith.subf %145, %127 : vector<1x128xf32>
    %cst_41 = arith.constant 0.918938517 : f32
    %147 = vector.broadcast %cst_41 : f32 to vector<1x128xf32>
    %148 = arith.addf %146, %147 : vector<1x128xf32>
    %149 = arith.addf %148, %142 : vector<1x128xf32>
    %150 = arith.subf %149, %125 : vector<1x128xf32>
    %cst_42 = arith.constant 0.0039682542 : f32
    %151 = vector.broadcast %cst_42 : f32 to vector<1x128xf32>
    %152 = arith.mulf %134, %151 : vector<1x128xf32>
    %cst_43 = arith.constant -0.00833333377 : f32
    %153 = vector.broadcast %cst_43 : f32 to vector<1x128xf32>
    %154 = arith.addf %153, %152 : vector<1x128xf32>
    %155 = arith.mulf %134, %154 : vector<1x128xf32>
    %cst_44 = arith.constant 0.0833333358 : f32
    %156 = vector.broadcast %cst_44 : f32 to vector<1x128xf32>
    %157 = arith.addf %156, %155 : vector<1x128xf32>
    %158 = arith.mulf %134, %157 : vector<1x128xf32>
    %cst_45 = arith.constant 5.000000e-01 : f32
    %159 = vector.broadcast %cst_45 : f32 to vector<1x128xf32>
    %160 = arith.mulf %159, %133 : vector<1x128xf32>
    %161 = arith.subf %128, %160 : vector<1x128xf32>
    %162 = arith.subf %161, %158 : vector<1x128xf32>
    %163 = arith.subf %162, %124 : vector<1x128xf32>
    %cst_46 = arith.constant dense<0.000000e+00> : vector<128xf32>
    %164 = vector.multi_reduction <add>, %85, %cst_46 [0] : vector<16x128xf32> to vector<128xf32>
    %165 = vector.shape_cast %164 : vector<128xf32> to vector<1x128xf32>
    %166 = arith.subf %150, %165 : vector<1x128xf32>
    %cst_47 = arith.constant 1.000000e+00 : f32
    %167 = vector.broadcast %cst_47 : f32 to vector<16x128xf32>
    %168 = arith.subf %31, %167 : vector<16x128xf32>
    %169 = vector.broadcast %163 : vector<1x128xf32> to vector<16x128xf32>
    %170 = arith.subf %98, %169 : vector<16x128xf32>
    %171 = arith.mulf %168, %170 : vector<16x128xf32>
    %cst_48 = arith.constant dense<0.000000e+00> : vector<128xf32>
    %172 = vector.multi_reduction <add>, %171, %cst_48 [0] : vector<16x128xf32> to vector<128xf32>
    %173 = vector.shape_cast %172 : vector<128xf32> to vector<1x128xf32>
    %174 = arith.addf %173, %166 : vector<1x128xf32>
    %cst_49 = arith.constant -27.899271 : f32
    %175 = vector.broadcast %cst_49 : f32 to vector<1x128xf32>
    %176 = arith.addf %174, %175 : vector<1x128xf32>
    %cst_50 = arith.constant 1.000000e-01 : f32
    %177 = vector.broadcast %cst_50 : f32 to vector<1x128xf32>
    %178 = arith.mulf %177, %176 : vector<1x128xf32>
    %179 = arith.addf %29, %178 : vector<1x128xf32>
    %cst_51 = arith.constant 0.000000e+00 : f32
    %180 = vector.broadcast %cst_51 : f32 to vector<1x128xf32>
    %181 = arith.select %7, %179, %180 : vector<1x128xi1>, vector<1x128xf32>
    %c0_52 = arith.constant 0 : index
    %c0_53 = arith.constant 0 : index
    %182 = vector.load %arg3[%c0_52, %c0_53] : memref<1x128xf32, #tpu.memory_space<vmem>>, vector<1x128xf32>
    tpu.vector_store %arg3[%c0_52, %c0_53], %181 {strides = array<i32>} : memref<1x128xf32, #tpu.memory_space<vmem>>, vector<1x128xf32>,
    return
  }
  func.func @transform_0(%arg0: i32) -> (i32, i32) {
    %c0_i32 = arith.constant 0 : i32
    %c0_i32_0 = arith.constant 0 : i32
    return %c0_i32, %arg0 : i32, i32
  }
  func.func @transform_1(%arg0: i32) -> (i32, i32) {
    %c0_i32 = arith.constant 0 : i32
    %c0_i32_0 = arith.constant 0 : i32
    return %c0_i32, %arg0 : i32, i32
  }
  func.func @transform_2(%arg0: i32) -> (i32, i32) {
    %c0_i32 = arith.constant 0 : i32
    %c0_i32_0 = arith.constant 0 : i32
    return %c0_i32, %arg0 : i32, i32
  }
}

</mosaic_0001>

<llo_original>
// kernel: tpu_custom_call.1
$region0: #{tpu_custom_call.1}
  #allocation0 [shape = 'u32[]', space=smem, size = 0x4, offset = 0x4, fixed_abs, tag = 'smem constant byte address 0x4 - core index']
  #allocation1 [shape = 'u32[144,128]{1,0:T(1,128)}', space=vmem, size = 0x12000, scoped, tag = 'internal scratch']
  %s0 = inlined_call_operand.vmem [shape: f32[16,8], index: 0, kind: input, shape index: {}]
  %s1 = inlined_call_operand.vmem [shape: s32[1,8], index: 1, kind: input, shape index: {}]
  %s2 = inlined_call_operand.hbm [shape: f32[1,128], index: 2, kind: output, shape index: {}]
  %s3 = sld [smem:[#allocation0]]
  $region18: #{tpu_custom_call.1} parent=0
    _
  %s5 = ssub.s32 1, %s3
  %s6 = scalar_select 0, %s5, %s3
  $region1: #{tpu_custom_call.1} parent=0
    #allocation2 [shape = 'u8[512]{0}', space=vmem, size = 0x400, scoped, tag = 'output window, operand 0, single buffered']
    #allocation3 [shape = 's32[1]{0}', space=sflag, size = 0x4, scoped, tag = 'scoped memory for tpu_custom_call.1']
    %7 = vsyncpa [#allocation3], 0
    // Predicated region
    $region2: #{tpu_custom_call.1} parent=1 // pred_check
      _
    $region3: #{tpu_custom_call.1} parent=1 // pred_check_branch
      %9 = sbr.rel (0) target = $region5
    $region4: #{tpu_custom_call.1} parent=1 // pred_region
      _
    $region5: #{tpu_custom_call.1} parent=1 // pred_fallthru
      _
    // Predicated region
    $region6: #{tpu_custom_call.1} parent=1 // pred_check
      _
    $region7: #{tpu_custom_call.1} parent=1 // pred_check_branch
      %11 = sbr.rel (0) target = $region9
    $region8: #{tpu_custom_call.1} parent=1 // pred_region
      _
    $region9: #{tpu_custom_call.1} parent=1 // pred_fallthru
      _
    %v12 = vld [vmem:[%s0] sm:$0xff]
    %v13 = vld [vmem:[%s0 + $0x8] sm:$0xff]
    %v14 = vld [vmem:[%s1] sm:$0x1]
    %v15 = vlaneseq
    %v16 = vand.u32 %v15, 127
    %s17 = smul.u32 0, 128
    %v18 = vstv %s17
    %v19 = vadd.s32 %v16, %v18
    %vm20 = vcmp.lt.s32.totalorder %v19, 8
    %v21 = vsel %vm20, 1, 0
    %vm22 = vcmp.eq.s32.totalorder %v21, 1
    %v23 = vsel %vm22, %v12, 1.0
    %v24 = vsel %vm22, %v13, 1.0
    %v25 = vlaneseq
    %v26 = vshrl.u32 %v25, 7
    %v27 = vadd.s32 %v26, 8
    %v28 = vlaneseq
    %v29 = vshrl.u32 %v28, 7
    %v30 = vsub.s32 0, %v29
    %v31 = vrot.slane %v14, %v30
    %vm32 = vcmp.eq.s32.totalorder %v26, %v31
    %vm33 = vcmp.eq.s32.totalorder %v27, %v31
    %v34 = vsel %vm32, 1, 0
    %v35 = vsel %vm33, 1, 0
    %v36 = vcvt.s32.f32 %v34
    %v37 = vcvt.s32.f32 %v35
    %v38 = vmax.f32 %v23, %v24
    %v39 = vrot.slane %v38, 4
    %v40 = vmax.f32 %v38, %v39
    %v41 = vrot.slane %v40, 2
    %v42 = vmax.f32 %v40, %v41
    %v43 = vrot.slane %v42, 1
    %v44 = vmax.f32 %v42, %v43
    %v45 = vsub.f32 %v23, %v44
    %v46 = vsub.f32 %v24, %v44
    %v47 = vmul.f32 %v45, 1.442695
    %v48 = vpow.pop %v47
    %v49 = vmul.f32 %v46, 1.442695
    %v50 = vpow.pop %v49
    %v51 = vadd.f32 %v48, %v50
    %v52 = vrot.slane %v51, 4
    %v53 = vadd.f32 %v51, %v52
    %v54 = vrot.slane %v53, 2
    %v55 = vadd.f32 %v53, %v54
    %v56 = vrot.slane %v55, 1
    %v57 = vadd.f32 %v55, %v56
    %v58 = vlog2.pop %v57
    %v59 = vmul.f32 %v58, 0.6931472
    %v60 = vadd.f32 %v59, %v44
    %v61 = vmul.f32 %v36, %v23
    %v62 = vmul.f32 %v37, %v24
    %v63 = vadd.f32 %v61, %v62
    %v64 = vrot.slane %v63, 4
    %v65 = vadd.f32 %v63, %v64
    %v66 = vrot.slane %v65, 2
    %v67 = vadd.f32 %v65, %v66
    %v68 = vrot.slane %v67, 1
    %v69 = vadd.f32 %v67, %v68
    %v70 = vsub.f32 %v60, %v69
    %v71 = vsel %vm32, 1.0, %v23
    %v72 = vsel %vm33, 1.0, %v24
    %v73 = vadd.f32 %v71, %v72
    %v74 = vrot.slane %v73, 4
    %v75 = vadd.f32 %v73, %v74
    %v76 = vrot.slane %v75, 2
    %v77 = vadd.f32 %v75, %v76
    %v78 = vrot.slane %v77, 1
    %v79 = vadd.f32 %v77, %v78
    %v80 = vadd.f32 %v71, 1.0
    %v81 = vadd.f32 %v72, 1.0
    %v82 = vmul.f32 %v71, %v80
    %v83 = vmul.f32 %v72, %v81
    %v84 = vadd.f32 %v71, 2.0
    %v85 = vadd.f32 %v72, 2.0
    %v86 = vadd.f32 %v71, 3.0
    %v87 = vadd.f32 %v72, 3.0
    %v88 = vmul.f32 %v84, %v86
    %v89 = vmul.f32 %v85, %v87
    %v90 = vmul.f32 %v82, %v88
    %v91 = vmul.f32 %v83, %v89
    %v92 = vmul.f32 %v71, 2.0
    %v93 = vmul.f32 %v72, 2.0
    %v94 = vadd.f32 %v92, 1.0
    %v95 = vadd.f32 %v93, 1.0
    %v96 = vmul.f32 %v94, %v88
    %v97 = vmul.f32 %v95, %v89
    %v98 = vadd.f32 %v92, 5.0
    %v99 = vadd.f32 %v93, 5.0
    %v100 = vmul.f32 %v98, %v82
    %v101 = vmul.f32 %v99, %v83
    %v102 = vadd.f32 %v96, %v100
    %v103 = vadd.f32 %v97, %v101
    %v104 = vrcp.pop %v90
    %v105 = vrcp.pop %v91
    %v106 = vmul.f32 %v90, %v104
    %v107 = vmul.f32 %v91, %v105
    %v108 = vsub.f32 2.0, %v106
    %v109 = vsub.f32 2.0, %v107
    %v110 = vmul.f32 %v104, %v108
    %v111 = vmul.f32 %v105, %v109
    %v112 = vmul.f32 %v102, %v110
    %v113 = vmul.f32 %v103, %v111
    %v114 = vlog2.pop %v90
    %v115 = vmul.f32 %v114, 0.6931472
    %v116 = vlog2.pop %v91
    %v117 = vmul.f32 %v116, 0.6931472
    %v118 = vadd.f32 %v71, 4.0
    %v119 = vadd.f32 %v72, 4.0
    %v120 = vlog2.pop %v118
    %v121 = vmul.f32 %v120, 0.6931472
    %v122 = vlog2.pop %v119
    %v123 = vmul.f32 %v122, 0.6931472
    %v124 = vrcp.pop %v118
    %v125 = vrcp.pop %v119
    %v126 = vmul.f32 %v118, %v124
    %v127 = vmul.f32 %v119, %v125
    %v128 = vsub.f32 2.0, %v126
    %v129 = vsub.f32 2.0, %v127
    %v130 = vmul.f32 %v124, %v128
    %v131 = vmul.f32 %v125, %v129
    %v132 = vmul.f32 %v130, %v130
    %v133 = vmul.f32 %v131, %v131
    %v134 = vmul.f32 %v132, 0.0007936508
    %v135 = vmul.f32 %v133, 0.0007936508
    %v136 = vadd.f32 %v134, -0.0027777778
    %v137 = vadd.f32 %v135, -0.0027777778
    %v138 = vmul.f32 %v132, %v136
    %v139 = vmul.f32 %v133, %v137
    %v140 = vadd.f32 %v138, 0.083333336
    %v141 = vadd.f32 %v139, 0.083333336
    %v142 = vmul.f32 %v130, %v140
    %v143 = vmul.f32 %v131, %v141
    %v144 = vsub.f32 %v118, 0.5
    %v145 = vsub.f32 %v119, 0.5
    %v146 = vmul.f32 %v144, %v121
    %v147 = vmul.f32 %v145, %v123
    %v148 = vsub.f32 %v146, %v118
    %v149 = vsub.f32 %v147, %v119
    %v150 = vadd.f32 %v148, 0.9189385
    %v151 = vadd.f32 %v149, 0.9189385
    %v152 = vadd.f32 %v150, %v142
    %v153 = vadd.f32 %v151, %v143
    %v154 = vsub.f32 %v152, %v115
    %v155 = vsub.f32 %v153, %v117
    %v156 = vmul.f32 %v132, 0.003968254
    %v157 = vmul.f32 %v133, 0.003968254
    %v158 = vadd.f32 %v156, -0.008333334
    %v159 = vadd.f32 %v157, -0.008333334
    %v160 = vmul.f32 %v132, %v158
    %v161 = vmul.f32 %v133, %v159
    %v162 = vadd.f32 %v160, 0.083333336
    %v163 = vadd.f32 %v161, 0.083333336
    %v164 = vmul.f32 %v132, %v162
    %v165 = vmul.f32 %v133, %v163
    %v166 = vmul.f32 %v130, 0.5
    %v167 = vmul.f32 %v131, 0.5
    %v168 = vsub.f32 %v121, %v166
    %v169 = vsub.f32 %v123, %v167
    %v170 = vsub.f32 %v168, %v164
    %v171 = vsub.f32 %v169, %v165
    %v172 = vsub.f32 %v170, %v112
    %v173 = vsub.f32 %v171, %v113
    %v174 = vadd.f32 %v79, 1.0
    %v175 = vmul.f32 %v79, %v174
    %v176 = vadd.f32 %v79, 2.0
    %v177 = vadd.f32 %v79, 3.0
    %v178 = vmul.f32 %v176, %v177
    %v179 = vmul.f32 %v175, %v178
    %v180 = vmul.f32 %v79, 2.0
    %v181 = vadd.f32 %v180, 1.0
    %v182 = vmul.f32 %v181, %v178
    %v183 = vadd.f32 %v180, 5.0
    %v184 = vmul.f32 %v183, %v175
    %v185 = vadd.f32 %v182, %v184
    %v186 = vrcp.pop %v179
    %v187 = vmul.f32 %v179, %v186
    %v188 = vsub.f32 2.0, %v187
    %v189 = vmul.f32 %v186, %v188
    %v190 = vmul.f32 %v185, %v189
    %v191 = vlog2.pop %v179
    %v192 = vmul.f32 %v191, 0.6931472
    %v193 = vadd.f32 %v79, 4.0
    %v194 = vlog2.pop %v193
    %v195 = vmul.f32 %v194, 0.6931472
    %v196 = vrcp.pop %v193
    %v197 = vmul.f32 %v193, %v196
    %v198 = vsub.f32 2.0, %v197
    %v199 = vmul.f32 %v196, %v198
    %v200 = vmul.f32 %v199, %v199
    %v201 = vmul.f32 %v200, 0.0007936508
    %v202 = vadd.f32 %v201, -0.0027777778
    %v203 = vmul.f32 %v200, %v202
    %v204 = vadd.f32 %v203, 0.083333336
    %v205 = vmul.f32 %v199, %v204
    %v206 = vsub.f32 %v193, 0.5
    %v207 = vmul.f32 %v206, %v195
    %v208 = vsub.f32 %v207, %v193
    %v209 = vadd.f32 %v208, 0.9189385
    %v210 = vadd.f32 %v209, %v205
    %v211 = vsub.f32 %v210, %v192
    %v212 = vmul.f32 %v200, 0.003968254
    %v213 = vadd.f32 %v212, -0.008333334
    %v214 = vmul.f32 %v200, %v213
    %v215 = vadd.f32 %v214, 0.083333336
    %v216 = vmul.f32 %v200, %v215
    %v217 = vmul.f32 %v199, 0.5
    %v218 = vsub.f32 %v195, %v217
    %v219 = vsub.f32 %v218, %v216
    %v220 = vsub.f32 %v219, %v190
    %v221 = vadd.f32 %v154, %v155
    %v222 = vrot.slane %v221, 4
    %v223 = vadd.f32 %v221, %v222
    %v224 = vrot.slane %v223, 2
    %v225 = vadd.f32 %v223, %v224
    %v226 = vrot.slane %v225, 1
    %v227 = vadd.f32 %v225, %v226
    %v228 = vsub.f32 %v211, %v227
    %v229 = vsub.f32 %v71, 1.0
    %v230 = vsub.f32 %v72, 1.0
    %v231 = vsub.f32 %v172, %v220
    %v232 = vsub.f32 %v173, %v220
    %v233 = vmul.f32 %v229, %v231
    %v234 = vmul.f32 %v230, %v232
    %v235 = vadd.f32 %v233, %v234
    %v236 = vrot.slane %v235, 4
    %v237 = vadd.f32 %v235, %v236
    %v238 = vrot.slane %v237, 2
    %v239 = vadd.f32 %v237, %v238
    %v240 = vrot.slane %v239, 1
    %v241 = vadd.f32 %v239, %v240
    %v242 = vadd.f32 %v241, %v228
    %v243 = vadd.f32 %v242, -27.899271
    %v244 = vmul.f32 %v243, 0.1
    %v245 = vadd.f32 %v70, %v244
    %v246 = vsel %vm20, %v245, 0.0
    %247 = vst [vmem:[#allocation2] sm:$0x1] %v246
    // Predicated region
    $region10: #{tpu_custom_call.1} parent=1 // pred_check
      _
    $region11: #{tpu_custom_call.1} parent=1 // pred_check_branch
      %249 = sbr.rel (0) target = $region13
    $region12: #{tpu_custom_call.1} parent=1 // pred_region
      %s251 = ssub.s32 16, 16
      %252 = vsyncadd [#allocation3], %s251
      %s254 = sshll.u32 [#allocation2], 4
      %s255 = int_to_ptr.vmem [resolvable:$true] %s254
      %257 = dma.vmem_to_hbm [thread:$0]  %s255, 16, %s2, [#allocation3]
    $region13: #{tpu_custom_call.1} parent=1 // pred_fallthru
      _
    // Predicated region
    $region14: #{tpu_custom_call.1} parent=1 // pred_check
      _
    $region15: #{tpu_custom_call.1} parent=1 // pred_check_branch
      %259 = sbr.rel (0) target = $region17
    $region16: #{tpu_custom_call.1} parent=1 // pred_region
      %260 = dma.done [#allocation3], 16
    $region17: #{tpu_custom_call.1} parent=1 // pred_fallthru
      _
    %261 = vsyncpa [#allocation3], 1

</llo_original>
